<compile_context>
chip_gen: v6e
topology: v6e:2x2x1
jax: 0.10.0
libtpu: 0.0.40
codegen_flags: <defaults>
</compile_context>

<pallas_src>
import functools

import jax
import jax.numpy as jnp
from jax import lax
from jax.experimental import pallas as pl
from jax.experimental.pallas import tpu as pltpu


def _vmem_capacity_bytes():
    """Per-core VMEM capacity; conservative (v7x-safe) fallback if the query fails."""
    try:
        cap = int(pltpu.get_tpu_info().vmem_capacity_bytes)
        return int(min(max(cap, 32 << 20), 128 << 20))
    except Exception:
        return 64 << 20


def _choose_tk(M, k128, itemsize, slab_budget_bytes, tk_cap=16384):
    """Largest 128-multiple divisor of k128 whose double-buffered (M, tk) slab
    fits slab_budget_bytes — so K never needs padding beyond 128 alignment."""
    q = k128 // 128
    per_unit = 2 * M * 128 * itemsize            # double-buffered, 128-wide slab
    max_units = int(max(1, min(slab_budget_bytes // per_unit, tk_cap // 128, q)))
    for d in range(max_units, 0, -1):            # max_units <= 128 -> cheap loop
        if q % d == 0:
            return 128 * d
    return 128


def _gram_kernel(f_ref, g_ref, *, inv_norm):
    """Accumulate an (M, tk) slab of F @ F.T into the resident (M, M) block."""
    k = pl.program_id(1)

    @pl.when(k == 0)
    def _():
        g_ref[...] = jnp.zeros_like(g_ref)

    fblk = f_ref[...]                                        # (M, tk)
    # Contract the slab's last axis with itself (F @ F.T) without materializing
    # a transpose; MXU accumulates in f32 into the resident output block.
    g_ref[...] += lax.dot_general(
        fblk, fblk, (((1,), (1,)), ((), ())),
        preferred_element_type=jnp.float32)

    @pl.when(k == pl.num_programs(1) - 1)
    def _():
        g_ref[...] = g_ref[...] * inv_norm                   # gram_matrix .div(b*c*h*w)


def _gram_partials(x, feature_dtype=jnp.bfloat16):
    """(b, c, h, w) -> (nsplit, b*c, b*c) partial Grams; sum(axis=0) is the Gram."""
    b, c, h, w = x.shape
    M, K = b * c, h * w
    inv_norm = 1.0 / float(b * c * h * w)

    feats = x.reshape(M, K).astype(feature_dtype)
    itemsize = jnp.dtype(feature_dtype).itemsize

    # Only 128-align K (usually a no-op for conv feature maps); never pad to tk.
    k128 = pl.cdiv(K, 128) * 128
    if k128 != K:
        feats = jnp.pad(feats, ((0, 0), (0, k128 - K)))      # zeros add nothing to F@F.T

    cap = _vmem_capacity_bytes()
    out_bytes = 2 * M * M * 4                                # output possibly double-buffered
    headroom = 4 << 20
    slab_budget = max(2 * M * 128 * itemsize,
                      int(cap * 0.8) - out_bytes - headroom)
    tk = _choose_tk(M, k128, itemsize, slab_budget)

    ksteps = k128 // tk
    # Split the reduction 2-way so both v7x TensorCores work ("parallel" axis);
    # on single-core v5e/v6e this only adds one extra tiny (M, M) partial.
    nsplit = 2 if (ksteps % 2 == 0 and ksteps >= 2) else 1
    ksteps_per = ksteps // nsplit

    vmem_limit = int(min(max(2 * M * tk * itemsize + out_bytes + headroom, 8 << 20), cap))

    kernel = functools.partial(_gram_kernel, inv_norm=inv_norm)

    return pl.pallas_call(
        kernel,
        out_shape=jax.ShapeDtypeStruct((nsplit, M, M), jnp.float32),
        grid_spec=pltpu.PrefetchScalarGridSpec(
            num_scalar_prefetch=0,
            grid=(nsplit, ksteps_per),
            in_specs=[pl.BlockSpec((M, tk),
                                   lambda s, k: (0, s * ksteps_per + k))],
            out_specs=pl.BlockSpec((None, M, M), lambda s, k: (s, 0, 0)),
        ),
        compiler_params=pltpu.CompilerParams(
            dimension_semantics=("parallel", "arbitrary"),
            vmem_limit_bytes=vmem_limit),
        cost_estimate=pl.CostEstimate(
            flops=2 * M * M * k128,
            bytes_accessed=M * k128 * itemsize + nsplit * M * M * 4,
            transcendentals=0),
    )(feats)


def gram_matrix(x, feature_dtype=jnp.bfloat16):
    """Pallas Gram matrix: (b, c, h, w) -> (b*c, b*c), G = F @ F.T / (b*c*h*w)."""
    # Tiny one-off combine of the (nsplit, M, M) partials.
    return jnp.sum(_gram_partials(x, feature_dtype), axis=0)


def _style_mse_kernel(p_ref, t_ref, loss_ref, *, inv_n):
    """Combine partial Grams and compute MSE vs. the target in one block."""
    g = jnp.sum(p_ref[...], axis=0)                          # (M, M) f32
    d = g - t_ref[...]
    loss_ref[...] = (jnp.sum(d * d, keepdims=True) * inv_n).astype(loss_ref.dtype)


def style_mse(partials, target):
    """mean((sum(partials, 0) - target)**2) as a single tiny Pallas block."""
    nsplit, M, _ = partials.shape
    footprint = 2 * (nsplit + 1) * M * M * 4 + (2 << 20)
    vmem_limit = int(min(max(footprint, 8 << 20), _vmem_capacity_bytes()))
    loss = pl.pallas_call(
        functools.partial(_style_mse_kernel, inv_n=1.0 / float(M * M)),
        out_shape=jax.ShapeDtypeStruct((1, 1), jnp.float32),
        grid_spec=pltpu.PrefetchScalarGridSpec(
            num_scalar_prefetch=0,
            grid=(1,),
            in_specs=[pl.BlockSpec((nsplit, M, M), lambda i: (0, 0, 0)),
                      pl.BlockSpec((M, M), lambda i: (0, 0))],
            out_specs=pl.BlockSpec((1, 1), lambda i: (0, 0)),
        ),
        compiler_params=pltpu.CompilerParams(vmem_limit_bytes=vmem_limit),
    )(partials.astype(jnp.float32), target.astype(jnp.float32))
    return loss[0, 0]


class StyleLoss:
    """JAX/Pallas equivalent of the PyTorch StyleLoss module.

    bf16 feature streaming (f32 MXU accumulation) is the default for HBM
    bandwidth; pass feature_dtype=jnp.float32 for exact PyTorch numerics.
    """

    def __init__(self, target_feature, feature_dtype=jnp.bfloat16):
        self.feature_dtype = feature_dtype
        # Gram-only path for the (detached) target: no throwaway MSE.
        self.target = gram_matrix(target_feature, feature_dtype)
        self.loss = None

    def __call__(self, x):
        partials = _gram_partials(x, self.feature_dtype)
        # Combine partials + MSE vs. the cached target in one tiny kernel,
        # so the combined (M, M) Gram never round-trips through HBM.
        self.loss = style_mse(partials, self.target)
        return x


def _gram_ref(x, dtype=jnp.float32):
    b, c, h, w = x.shape
    f = x.reshape(b * c, h * w).astype(dtype).astype(jnp.float32)
    return (f @ f.T) / (b * c * h * w)


if __name__ == "__main__":
    key = jax.random.PRNGKey(0)
    k1, k2, k3, k4 = jax.random.split(key, 4)

    # --- exact f32 path, tiny feature map (single-step grid) ----------------
    target_feature = jax.random.normal(k1, (2, 4, 16, 16), dtype=jnp.float32)
    x = jax.random.normal(k2, (2, 4, 16, 16), dtype=jnp.float32)

    m32 = StyleLoss(target_feature, feature_dtype=jnp.float32)
    out = m32(x)
    jax.block_until_ready(out)
    jax.block_until_ready(m32.loss)

    G_ref = _gram_ref(x)
    T_ref = _gram_ref(target_feature)
    loss_ref = jnp.mean((G_ref - T_ref) ** 2)

    assert out.shape == x.shape and bool(jnp.array_equal(out, x))
    assert jnp.allclose(m32.target, T_ref, atol=1e-5, rtol=1e-5)
    assert jnp.allclose(m32.loss, loss_ref, atol=1e-7, rtol=1e-4)

    # --- default bf16-streaming path, larger K (multi-step + 2-way split) ---
    tf2 = jax.random.normal(k3, (1, 8, 256, 256), dtype=jnp.float32)
    x2 = jax.random.normal(k4, (1, 8, 256, 256), dtype=jnp.float32)

    mbf = StyleLoss(tf2)                       # default: bf16 feature streaming
    out2 = mbf(x2)
    jax.block_until_ready(out2)
    jax.block_until_ready(mbf.loss)

    G_bf = _gram_ref(x2, jnp.bfloat16)
    T_bf = _gram_ref(tf2, jnp.bfloat16)
    loss_bf_ref = jnp.mean((G_bf - T_bf) ** 2)

    assert bool(jnp.array_equal(out2, x2))
    assert jnp.allclose(mbf.target, T_bf, atol=1e-5, rtol=1e-3)
    assert jnp.allclose(mbf.loss, loss_bf_ref, atol=1e-7, rtol=1e-2)

    print("KERNEL_OK")
</pallas_src>

<mosaic_0001>
module attributes {stable_mosaic.version = 11 : i64} {
  func.func @_gram_kernel(%arg0: i32, %arg1: i32, %arg2: memref<8x256xf32, #tpu.memory_space<vmem>>, %arg3: memref<1x8x8xf32, #tpu.memory_space<vmem>>) attributes {dimension_semantics = [#tpu.dimension_semantics<parallel>, #tpu.dimension_semantics<arbitrary>], iteration_bounds = array<i64: 1, 1>, scalar_prefetch = 0 : i64, scratch_operands = 0 : i64, tpu.core_type = #tpu.core_type<tc>, window_params = [{transform_indices = @transform_0, window_bounds = array<i64: 8, 256>}, {transform_indices = @transform_1, window_bounds = array<i64: 1, 8, 8>}]} {
    %c0_i32 = arith.constant 0 : i32
    %0 = arith.cmpi eq, %arg1, %c0_i32 : i32
    %1 = arith.extui %0 : i1 to i32
    %c0_i32_0 = arith.constant 0 : i32
    %2 = arith.cmpi ne, %1, %c0_i32_0 : i32
    scf.if %2 {
      %cst_10 = arith.constant 0.000000e+00 : f32
      %14 = vector.broadcast %cst_10 : f32 to vector<8x8xf32>
      %c0_11 = arith.constant 0 : index
      %c0_12 = arith.constant 0 : index
      %c0_13 = arith.constant 0 : index
      %15 = vector.load %arg3[%c0_11, %c0_12, %c0_13] : memref<1x8x8xf32, #tpu.memory_space<vmem>>, vector<1x8x8xf32>
      %16 = vector.shape_cast %15 : vector<1x8x8xf32> to vector<8x8xf32>
      %17 = vector.shape_cast %14 : vector<8x8xf32> to vector<1x8x8xf32>
      tpu.vector_store %arg3[%c0_11, %c0_12, %c0_13], %17 {strides = array<i32>} : memref<1x8x8xf32, #tpu.memory_space<vmem>>, vector<1x8x8xf32>,
    } else {
    }
    %c0 = arith.constant 0 : index
    %c0_1 = arith.constant 0 : index
    %3 = vector.load %arg2[%c0, %c0_1] : memref<8x256xf32, #tpu.memory_space<vmem>>, vector<8x256xf32>
    %c0_2 = arith.constant 0 : index
    %c0_3 = arith.constant 0 : index
    %c0_4 = arith.constant 0 : index
    %4 = vector.load %arg3[%c0_2, %c0_3, %c0_4] : memref<1x8x8xf32, #tpu.memory_space<vmem>>, vector<1x8x8xf32>
    %5 = vector.shape_cast %4 : vector<1x8x8xf32> to vector<8x8xf32>
    %cst = arith.constant dense<0.000000e+00> : vector<8x8xf32>
    %6 = tpu.matmul %3, %3, %cst {dimension_numbers = #tpu.dot_dimension_numbers<[1], [1], [0], [0], [0, 0, 1, 0], [], []>} : vector<8x256xf32>, vector<8x256xf32>, vector<8x8xf32> -> vector<8x8xf32>
    %7 = arith.addf %5, %6 : vector<8x8xf32>
    %c0_5 = arith.constant 0 : index
    %c0_6 = arith.constant 0 : index
    %c0_7 = arith.constant 0 : index
    %8 = vector.load %arg3[%c0_5, %c0_6, %c0_7] : memref<1x8x8xf32, #tpu.memory_space<vmem>>, vector<1x8x8xf32>
    %9 = vector.shape_cast %8 : vector<1x8x8xf32> to vector<8x8xf32>
    %10 = vector.shape_cast %7 : vector<8x8xf32> to vector<1x8x8xf32>
    tpu.vector_store %arg3[%c0_5, %c0_6, %c0_7], %10 {strides = array<i32>} : memref<1x8x8xf32, #tpu.memory_space<vmem>>, vector<1x8x8xf32>,
    %c0_i32_8 = arith.constant 0 : i32
    %11 = arith.cmpi eq, %arg1, %c0_i32_8 : i32
    %12 = arith.extui %11 : i1 to i32
    %c0_i32_9 = arith.constant 0 : i32
    %13 = arith.cmpi ne, %12, %c0_i32_9 : i32
    scf.if %13 {
      %c0_10 = arith.constant 0 : index
      %c0_11 = arith.constant 0 : index
      %c0_12 = arith.constant 0 : index
      %14 = vector.load %arg3[%c0_10, %c0_11, %c0_12] : memref<1x8x8xf32, #tpu.memory_space<vmem>>, vector<1x8x8xf32>
      %15 = vector.shape_cast %14 : vector<1x8x8xf32> to vector<8x8xf32>
      %cst_13 = arith.constant 4.8828125E-4 : f32
      %16 = vector.broadcast %cst_13 : f32 to vector<8x8xf32>
      %17 = arith.mulf %15, %16 : vector<8x8xf32>
      %c0_14 = arith.constant 0 : index
      %c0_15 = arith.constant 0 : index
      %c0_16 = arith.constant 0 : index
      %18 = vector.load %arg3[%c0_14, %c0_15, %c0_16] : memref<1x8x8xf32, #tpu.memory_space<vmem>>, vector<1x8x8xf32>
      %19 = vector.shape_cast %18 : vector<1x8x8xf32> to vector<8x8xf32>
      %20 = vector.shape_cast %17 : vector<8x8xf32> to vector<1x8x8xf32>
      tpu.vector_store %arg3[%c0_14, %c0_15, %c0_16], %20 {strides = array<i32>} : memref<1x8x8xf32, #tpu.memory_space<vmem>>, vector<1x8x8xf32>,
    } else {
    }
    return
  }
  func.func @transform_0(%arg0: i32, %arg1: i32) -> (i32, i32) {
    %c1_i32 = arith.constant 1 : i32
    %0 = arith.muli %arg0, %c1_i32 : i32
    %1 = arith.addi %0, %arg1 : i32
    %c0_i32 = arith.constant 0 : i32
    %c0_i32_0 = arith.constant 0 : i32
    return %c0_i32, %1 : i32, i32
  }
  func.func @transform_1(%arg0: i32, %arg1: i32) -> (i32, i32, i32) {
    %c0_i32 = arith.constant 0 : i32
    %c0_i32_0 = arith.constant 0 : i32
    %c0_i32_1 = arith.constant 0 : i32
    return %arg0, %c0_i32, %c0_i32_0 : i32, i32, i32
  }
}

</mosaic_0001>

<llo_original>
// kernel: tpu_custom_call.1
$region0: #{tpu_custom_call.1}
  #allocation0 [shape = 'u32[]', space=smem, size = 0x4, offset = 0x4, fixed_abs, tag = 'smem constant byte address 0x4 - core index']
  #allocation1 [shape = 'u32[144,128]{1,0:T(1,128)}', space=vmem, size = 0x12000, scoped, tag = 'internal scratch']
  %s0 = inlined_call_operand.hbm [shape: f32[8,256], index: 0, kind: input, shape index: {}]
  %s1 = inlined_call_operand.hbm [shape: f32[1,8,8], index: 1, kind: output, shape index: {}]
  %s2 = sld [smem:[#allocation0]]
  $region26: #{tpu_custom_call.1} parent=0
    _
  %s4 = ssub.s32 1, %s2
  %s5 = scalar_select 0, %s4, %s2
  $region1: #{tpu_custom_call.1} parent=0
    #allocation2 [shape = 'u8[8192]{0}', space=vmem, size = 0x2000, scoped, tag = 'input window, operand 0, single buffered']
    #allocation3 [shape = 's32[1]{0}', space=sflag, size = 0x4, scoped, tag = 'scoped memory for tpu_custom_call.1']
    #allocation4 [shape = 's32[1]{0}', space=sflag, size = 0x4, scoped, tag = 'scoped memory for tpu_custom_call.1']
    #allocation5 [shape = 'u8[4096]{0}', space=vmem, size = 0x1000, scoped, tag = 'output window, operand 0, single buffered']
    %6 = vsyncpa [#allocation3], 0
    %7 = vsyncpa [#allocation4], 0
    // Predicated region
    $region2: #{tpu_custom_call.1} parent=1 // pred_check
      _
    $region3: #{tpu_custom_call.1} parent=1 // pred_check_branch
      %9 = sbr.rel (0) target = $region5
    $region4: #{tpu_custom_call.1} parent=1 // pred_region
      %s10 = sadd.s32 0, 0
      %s11 = smul.u32 2, %s10
      %s13 = ssub.s32 256, 256
      %14 = vsyncadd [#allocation3], %s13
      %s15 = smul.addr %s11, 128
      %s16 = scalar_lea.hbm %s0, %s15
      %s18 = sshll.u32 [#allocation2], 4
      %s19 = int_to_ptr.vmem [resolvable:$true] %s18
      %21 = dma.hbm_to_vmem [thread:$0]  %s16, 256, %s19, [#allocation3]
    $region5: #{tpu_custom_call.1} parent=1 // pred_fallthru
      _
    // Predicated region
    $region6: #{tpu_custom_call.1} parent=1 // pred_check
      _
    $region7: #{tpu_custom_call.1} parent=1 // pred_check_branch
      %23 = sbr.rel (0) target = $region9
    $region8: #{tpu_custom_call.1} parent=1 // pred_region
      %24 = dma.done [#allocation3], 256
    $region9: #{tpu_custom_call.1} parent=1 // pred_fallthru
      _
    %s25 = sadd.s32 0, 0
    %s26 = smul.u32 2, %s25
    %p27 = scmp.eq.s32.totalorder 0, 0
    // Predicated region
    $region10: #{tpu_custom_call.1} parent=1 // pred_check
      %p28 = pneg %p27
    $region11: #{tpu_custom_call.1} parent=1 // pred_check_branch
      %30 = sbr.rel (%p28) target = $region13
    $region12: #{tpu_custom_call.1} parent=1 // pred_region
      %vm31 = vcmask 64512
      %32 = vst.msk [vmem:[#allocation5] sm:$0xff] %vm31, 0.0
    $region13: #{tpu_custom_call.1} parent=1 // pred_fallthru
      _
    %v33 = vld [vmem:[#allocation2] sm:$0xff]
    %v34 = vld [vmem:[#allocation2 + $0x8] sm:$0xff]
    %v35 = vld [vmem:[#allocation5] sm:$0xff]
    %36 = vmatprep.subr.mxu0 0.0
    %37 = vmatpush1.xpose.msra.mxu0 0.0
    %38 = vmatprep.subr.mxu0 0.0
    %39 = vmatpush1.xpose.msra.mxu0 0.0
    %40 = vmatprep.subr.mxu0 0.0
    %41 = vmatpush1.xpose.msra.mxu0 0.0
    %42 = vmatprep.subr.mxu0 0.0
    %43 = vmatpush1.xpose.msra.mxu0 0.0
    %44 = vmatprep.subr.mxu0 0.0
    %45 = vmatpush1.xpose.msra.mxu0 0.0
    %46 = vmatprep.subr.mxu0 0.0
    %47 = vmatpush1.xpose.msra.mxu0 0.0
    %48 = vmatprep.subr.mxu0 0.0
    %49 = vmatpush1.xpose.msra.mxu0 0.0
    %50 = vmatprep.subr.mxu0 0.0
    %51 = vmatpush1.xpose.msra.mxu0 0.0
    %52 = vmatprep.subr.mxu0 0.0
    %53 = vmatpush1.xpose.msra.mxu0 0.0
    %54 = vmatprep.subr.mxu0 0.0
    %55 = vmatpush1.xpose.msra.mxu0 0.0
    %56 = vmatprep.subr.mxu0 0.0
    %57 = vmatpush1.xpose.msra.mxu0 0.0
    %58 = vmatprep.subr.mxu0 0.0
    %59 = vmatpush1.xpose.msra.mxu0 0.0
    %60 = vmatprep.subr.mxu0 0.0
    %61 = vmatpush1.xpose.msra.mxu0 0.0
    %62 = vmatprep.subr.mxu0 0.0
    %63 = vmatpush1.xpose.msra.mxu0 0.0
    %64 = vmatprep.subr.mxu0 0.0
    %65 = vmatpush1.xpose.msra.mxu0 0.0
    %66 = vmatprep.subr.mxu0 %v34
    %67 = vmatpush1.xpose.msra.mxu0 %v33
    %68 = vmatprep.subr.mxu0 0.0
    %69 = vmatpush2.xpose.msra.mxu0 0.0
    %70 = vmatprep.subr.mxu0 0.0
    %71 = vmatpush2.xpose.msra.mxu0 0.0
    %72 = vmatprep.subr.mxu0 0.0
    %73 = vmatpush2.xpose.msra.mxu0 0.0
    %74 = vmatprep.subr.mxu0 0.0
    %75 = vmatpush2.xpose.msra.mxu0 0.0
    %76 = vmatprep.subr.mxu0 0.0
    %77 = vmatpush2.xpose.msra.mxu0 0.0
    %78 = vmatprep.subr.mxu0 0.0
    %79 = vmatpush2.xpose.msra.mxu0 0.0
    %80 = vmatprep.subr.mxu0 0.0
    %81 = vmatpush2.xpose.msra.mxu0 0.0
    %82 = vmatprep.subr.mxu0 0.0
    %83 = vmatpush2.xpose.msra.mxu0 0.0
    %84 = vmatprep.subr.mxu0 0.0
    %85 = vmatpush2.xpose.msra.mxu0 0.0
    %86 = vmatprep.subr.mxu0 0.0
    %87 = vmatpush2.xpose.msra.mxu0 0.0
    %88 = vmatprep.subr.mxu0 0.0
    %89 = vmatpush2.xpose.msra.mxu0 0.0
    %90 = vmatprep.subr.mxu0 0.0
    %91 = vmatpush2.xpose.msra.mxu0 0.0
    %92 = vmatprep.subr.mxu0 0.0
    %93 = vmatpush2.xpose.msra.mxu0 0.0
    %94 = vmatprep.subr.mxu0 0.0
    %95 = vmatpush2.xpose.msra.mxu0 0.0
    %96 = vmatprep.subr.mxu0 0.0
    %97 = vmatpush2.xpose.msra.mxu0 0.0
    %98 = vmatprep.subr.mxu0 0.0
    %99 = vmatpush2.xpose.msra.mxu0 0.0
    %100 = vmatprep.mubr.f32.mxu0 %v34
    %101 = vmatmul.mubr.f32.gmra.mxu0 %v33
    %v102 = vpop.f32.mrf.mxu0
    %v103 = vadd.f32 0.0, %v102
    %v104 = vpop.f32.mrf.mxu0
    %105 = vdwg.mxu0
    %v106 = vadd.f32 %v35, %v103
    %vm107 = vcmask 64512
    %108 = vst.msk [vmem:[#allocation5] sm:$0xff] %vm107, %v106
    // Predicated region
    $region14: #{tpu_custom_call.1} parent=1 // pred_check
      %p109 = pneg %p27
    $region15: #{tpu_custom_call.1} parent=1 // pred_check_branch
      %111 = sbr.rel (%p109) target = $region17
    $region16: #{tpu_custom_call.1} parent=1 // pred_region
      %v112 = vld [vmem:[#allocation5] sm:$0xff]
      %v113 = vmul.f32 %v112, 0.00048828125
      %114 = vst.msk [vmem:[#allocation5] sm:$0xff] %vm107, %v113
    $region17: #{tpu_custom_call.1} parent=1 // pred_fallthru
      _
    // Predicated region
    $region18: #{tpu_custom_call.1} parent=1 // pred_check
      _
    $region19: #{tpu_custom_call.1} parent=1 // pred_check_branch
      %116 = sbr.rel (0) target = $region21
    $region20: #{tpu_custom_call.1} parent=1 // pred_region
      %s118 = ssub.s32 128, 128
      %119 = vsyncadd [#allocation4], %s118
      %s121 = sshll.u32 [#allocation5], 4
      %s122 = int_to_ptr.vmem [resolvable:$true] %s121
      %124 = dma.vmem_to_hbm [thread:$0]  %s122, 128, %s1, [#allocation4]
    $region21: #{tpu_custom_call.1} parent=1 // pred_fallthru
      _
    // Predicated region
    $region22: #{tpu_custom_call.1} parent=1 // pred_check
      _
    $region23: #{tpu_custom_call.1} parent=1 // pred_check_branch
      %126 = sbr.rel (0) target = $region25
    $region24: #{tpu_custom_call.1} parent=1 // pred_region
      %127 = dma.done [#allocation4], 128
    $region25: #{tpu_custom_call.1} parent=1 // pred_fallthru
      _
    %128 = vsyncpa [#allocation3], 1
    %129 = vsyncpa [#allocation4], 1

</llo_original>
